<compile_context>
chip_gen: v6e
topology: v6e:2x2x1
jax: 0.10.0
libtpu: 0.0.40
codegen_flags: <defaults>
</compile_context>

<pallas_src>
import jax
import jax.numpy as jnp
from jax.experimental import pallas as pl
from jax.experimental.pallas import tpu as pltpu

_TN = 512   # lane width (multiple of 128) -> unmasked vst
_TM = 512   # row tile: 512x512 f32 = 1 MiB per block buffer


def _step_activation_kernel(factor_ref, k_ref, x_ref, o_ref):
    # factor_ref: (1,) f32 in SMEM; k_ref: (4,) f32 in SMEM with
    # k_i = exp((1-hm)*f), exp((1+hm)*f), exp((2-hm)*f), exp((2+hm)*f)
    f = factor_ref[0]

    z = f * x_ref[...]
    e = jnp.exp(-z)                      # single EUP transcendental per element

    s0 = 1.0 / (1.0 + e)                 # sigmoid(z)
    s1 = 1.0 / (1.0 + k_ref[0] * e)      # sigmoid(z - (1-hm)*f)
    s2 = 1.0 / (1.0 + k_ref[1] * e)      # sigmoid(z - (1+hm)*f)
    s3 = 1.0 / (1.0 + k_ref[2] * e)      # sigmoid(z - (2-hm)*f)
    s4 = 1.0 / (1.0 + k_ref[3] * e)      # sigmoid(z - (2+hm)*f)

    out = s0 + 0.5 * (s1 + s2 + s3 + s4)  # factored 0.5: one vmul, not four
    o_ref[...] = out.astype(o_ref.dtype)


def step_activation(x, factor, half_margin):
    """x: (N, C, H, W) float32; factor/half_margin: shape-(1,) float32 params."""
    orig_shape = x.shape
    total = x.size

    # Precompute the four shift exponentials from the parameters (tiny scalar
    # JAX work outside the kernel; keeps the kernel to one vector exp/elem).
    f = factor[0]
    hm = half_margin[0]
    ks = jnp.exp(jnp.stack([(1.0 - hm) * f, (1.0 + hm) * f,
                            (2.0 - hm) * f, (2.0 + hm) * f])).astype(jnp.float32)

    # Lane-dense slab: flatten, pad to a multiple of _TN, reshape to (rows, _TN).
    padded = pl.cdiv(total, _TN) * _TN
    flat = x.reshape(-1)
    if padded != total:
        flat = jnp.pad(flat, (0, padded - total))
    rows = padded // _TN
    x2d = flat.reshape(rows, _TN)

    # Row tile: full rows extent when small (block dim == array dim is legal),
    # otherwise 512 (divisible by 8); Pallas masks any partial edge block.
    tm = _TM if rows >= _TM else rows
    grid = (pl.cdiv(rows, tm),)

    cost = pl.CostEstimate(
        flops=14 * padded,          # scalar-bcast mul, 4 muls, adds, recips (approx)
        transcendentals=padded,     # one exp per element after the rewrite
        bytes_accessed=8 * padded,  # 4 B read + 4 B write per element
    )

    out2d = pl.pallas_call(
        _step_activation_kernel,
        out_shape=jax.ShapeDtypeStruct((rows, _TN), x.dtype),
        grid_spec=pltpu.PrefetchScalarGridSpec(
            num_scalar_prefetch=0,
            grid=grid,
            in_specs=[
                pl.BlockSpec(memory_space=pltpu.MemorySpace.SMEM),  # factor (1,)
                pl.BlockSpec(memory_space=pltpu.MemorySpace.SMEM),  # k consts (4,)
                pl.BlockSpec((tm, _TN), lambda i: (i, 0)),          # x tile
            ],
            out_specs=pl.BlockSpec((tm, _TN), lambda i: (i, 0)),
        ),
        compiler_params=pltpu.CompilerParams(
            dimension_semantics=("parallel",),  # shards across both TCs on v7x
        ),
        cost_estimate=cost,
    )(factor, ks, x2d)

    out_flat = out2d.reshape(-1)
    if padded != total:
        out_flat = out_flat[:total]
    return out_flat.reshape(orig_shape)


def _reference(x, factor, half_margin):
    f = factor[0]
    hm = half_margin[0]
    z = f * x
    return (jax.nn.sigmoid(z)
            + 0.5 * jax.nn.sigmoid(z - (1.0 - hm) * f)
            + 0.5 * jax.nn.sigmoid(z - (1.0 + hm) * f)
            + 0.5 * jax.nn.sigmoid(z - (2.0 - hm) * f)
            + 0.5 * jax.nn.sigmoid(z - (2.0 + hm) * f))


if __name__ == "__main__":
    key = jax.random.PRNGKey(0)
    # small NCHW input consistent with an activation module
    x = jax.random.normal(key, (2, 4, 16, 16), dtype=jnp.float32) * 1.5

    # deterministic parameter init, matching the module defaults
    factor = jnp.array([10.0], dtype=jnp.float32)
    half_margin = jnp.array([0.2], dtype=jnp.float32)

    out = step_activation(x, factor, half_margin)
    out = jax.block_until_ready(out)

    ref = _reference(x, factor, half_margin)
    assert out.shape == x.shape
    assert jnp.allclose(out, ref, atol=1e-5, rtol=1e-5), "mismatch vs reference"

    print("KERNEL_OK")
</pallas_src>

<mosaic_0001>
module attributes {stable_mosaic.version = 11 : i64} {
  func.func @_step_activation_kernel(%arg0: i32, %arg1: memref<1xf32, #tpu.memory_space<smem>>, %arg2: memref<4xf32, #tpu.memory_space<smem>>, %arg3: memref<4x512xf32, #tpu.memory_space<vmem>>, %arg4: memref<4x512xf32, #tpu.memory_space<vmem>>) attributes {dimension_semantics = [#tpu.dimension_semantics<parallel>], iteration_bounds = array<i64: 1>, scalar_prefetch = 0 : i64, scratch_operands = 0 : i64, tpu.core_type = #tpu.core_type<tc>, window_params = [{transform_indices = @transform_0, window_bounds = array<i64: 1>}, {transform_indices = @transform_1, window_bounds = array<i64: 4>}, {transform_indices = @transform_2, window_bounds = array<i64: 4, 512>}, {transform_indices = @transform_3, window_bounds = array<i64: 4, 512>}]} {
    %c0 = arith.constant 0 : index
    %0 = memref.load %arg1[%c0] : memref<1xf32, #tpu.memory_space<smem>>
    %c0_0 = arith.constant 0 : index
    %c0_1 = arith.constant 0 : index
    %1 = vector.load %arg3[%c0_0, %c0_1] : memref<4x512xf32, #tpu.memory_space<vmem>>, vector<4x512xf32>
    %2 = vector.broadcast %0 : f32 to vector<4x512xf32>
    %3 = arith.mulf %2, %1 : vector<4x512xf32>
    %cst = arith.constant 0.000000e+00 : f32
    %4 = vector.broadcast %cst : f32 to vector<4x512xf32>
    %5 = arith.subf %4, %3 : vector<4x512xf32>
    %6 = math.exp %5 : vector<4x512xf32>
    %cst_2 = arith.constant 1.000000e+00 : f32
    %7 = vector.broadcast %cst_2 : f32 to vector<4x512xf32>
    %8 = arith.addf %7, %6 : vector<4x512xf32>
    %cst_3 = arith.constant 1.000000e+00 : f32
    %9 = vector.broadcast %cst_3 : f32 to vector<4x512xf32>
    %10 = arith.divf %9, %8 : vector<4x512xf32>
    %c0_4 = arith.constant 0 : index
    %11 = memref.load %arg2[%c0_4] : memref<4xf32, #tpu.memory_space<smem>>
    %12 = vector.broadcast %11 : f32 to vector<4x512xf32>
    %13 = arith.mulf %12, %6 : vector<4x512xf32>
    %cst_5 = arith.constant 1.000000e+00 : f32
    %14 = vector.broadcast %cst_5 : f32 to vector<4x512xf32>
    %15 = arith.addf %14, %13 : vector<4x512xf32>
    %cst_6 = arith.constant 1.000000e+00 : f32
    %16 = vector.broadcast %cst_6 : f32 to vector<4x512xf32>
    %17 = arith.divf %16, %15 : vector<4x512xf32>
    %c1 = arith.constant 1 : index
    %18 = memref.load %arg2[%c1] : memref<4xf32, #tpu.memory_space<smem>>
    %19 = vector.broadcast %18 : f32 to vector<4x512xf32>
    %20 = arith.mulf %19, %6 : vector<4x512xf32>
    %cst_7 = arith.constant 1.000000e+00 : f32
    %21 = vector.broadcast %cst_7 : f32 to vector<4x512xf32>
    %22 = arith.addf %21, %20 : vector<4x512xf32>
    %cst_8 = arith.constant 1.000000e+00 : f32
    %23 = vector.broadcast %cst_8 : f32 to vector<4x512xf32>
    %24 = arith.divf %23, %22 : vector<4x512xf32>
    %c2 = arith.constant 2 : index
    %25 = memref.load %arg2[%c2] : memref<4xf32, #tpu.memory_space<smem>>
    %26 = vector.broadcast %25 : f32 to vector<4x512xf32>
    %27 = arith.mulf %26, %6 : vector<4x512xf32>
    %cst_9 = arith.constant 1.000000e+00 : f32
    %28 = vector.broadcast %cst_9 : f32 to vector<4x512xf32>
    %29 = arith.addf %28, %27 : vector<4x512xf32>
    %cst_10 = arith.constant 1.000000e+00 : f32
    %30 = vector.broadcast %cst_10 : f32 to vector<4x512xf32>
    %31 = arith.divf %30, %29 : vector<4x512xf32>
    %c3 = arith.constant 3 : index
    %32 = memref.load %arg2[%c3] : memref<4xf32, #tpu.memory_space<smem>>
    %33 = vector.broadcast %32 : f32 to vector<4x512xf32>
    %34 = arith.mulf %33, %6 : vector<4x512xf32>
    %cst_11 = arith.constant 1.000000e+00 : f32
    %35 = vector.broadcast %cst_11 : f32 to vector<4x512xf32>
    %36 = arith.addf %35, %34 : vector<4x512xf32>
    %cst_12 = arith.constant 1.000000e+00 : f32
    %37 = vector.broadcast %cst_12 : f32 to vector<4x512xf32>
    %38 = arith.divf %37, %36 : vector<4x512xf32>
    %39 = arith.addf %17, %24 : vector<4x512xf32>
    %40 = arith.addf %39, %31 : vector<4x512xf32>
    %41 = arith.addf %40, %38 : vector<4x512xf32>
    %cst_13 = arith.constant 5.000000e-01 : f32
    %42 = vector.broadcast %cst_13 : f32 to vector<4x512xf32>
    %43 = arith.mulf %42, %41 : vector<4x512xf32>
    %44 = arith.addf %10, %43 : vector<4x512xf32>
    %c0_14 = arith.constant 0 : index
    %c0_15 = arith.constant 0 : index
    %45 = vector.load %arg4[%c0_14, %c0_15] : memref<4x512xf32, #tpu.memory_space<vmem>>, vector<4x512xf32>
    tpu.vector_store %arg4[%c0_14, %c0_15], %44 {strides = array<i32>} : memref<4x512xf32, #tpu.memory_space<vmem>>, vector<4x512xf32>,
    return
  }
  func.func @transform_0(%arg0: i32) -> i32 {
    %c0_i32 = arith.constant 0 : i32
    %c0_i32_0 = arith.constant 0 : i32
    return %c0_i32 : i32
  }
  func.func @transform_1(%arg0: i32) -> i32 {
    %c0_i32 = arith.constant 0 : i32
    %c0_i32_0 = arith.constant 0 : i32
    return %c0_i32 : i32
  }
  func.func @transform_2(%arg0: i32) -> (i32, i32) {
    %c0_i32 = arith.constant 0 : i32
    %c0_i32_0 = arith.constant 0 : i32
    return %arg0, %c0_i32 : i32, i32
  }
  func.func @transform_3(%arg0: i32) -> (i32, i32) {
    %c0_i32 = arith.constant 0 : i32
    %c0_i32_0 = arith.constant 0 : i32
    return %arg0, %c0_i32 : i32, i32
  }
}

</mosaic_0001>

<llo_original>
// kernel: tpu_custom_call.1
$region0: #{tpu_custom_call.1}
  #allocation0 [shape = 'u32[]', space=smem, size = 0x4, offset = 0x4, fixed_abs, tag = 'smem constant byte address 0x4 - core index']
  #allocation1 [shape = 'u32[144,128]{1,0:T(1,128)}', space=vmem, size = 0x12000, scoped, tag = 'internal scratch']
  #allocation2 [shape = 'f32[1]{0:T(128)S(6)}', space=smem, size = 0x200, scoped, tag = 'scoped memory for tpu_custom_call.1']
  %s0 = inlined_call_operand.<no memory space> [shape: f32[1], index: 0, kind: input, shape index: {}]
  %s1 = inlined_call_operand.vmem [shape: f32[4], index: 1, kind: input, shape index: {}]
  %s2 = inlined_call_operand.hbm [shape: f32[4,512], index: 2, kind: input, shape index: {}]
  %s3 = inlined_call_operand.hbm [shape: f32[4,512], index: 3, kind: output, shape index: {}]
  %s4 = sld [smem:[#allocation0]]
  $region30: #{tpu_custom_call.1} parent=0
    _
  %s6 = ssub.s32 1, %s4
  %s7 = scalar_select 0, %s6, %s4
  %8 = sst [smem:[#allocation2]] %s0
  $region1: #{tpu_custom_call.1} parent=0
    #allocation3 [shape = 'u8[512]{0}', space=smem, size = 0x200, scoped, tag = 'input window, operand 1, single buffered']
    #allocation4 [shape = 's32[1]{0}', space=sflag, size = 0x4, scoped, tag = 'scoped memory for tpu_custom_call.1']
    #allocation5 [shape = 's32[1]{0}', space=sflag, size = 0x4, scoped, tag = 'scoped memory for tpu_custom_call.1']
    #allocation6 [shape = 's32[1]{0}', space=sflag, size = 0x4, scoped, tag = 'scoped memory for tpu_custom_call.1']
    #allocation7 [shape = 'u8[8192]{0}', space=vmem, size = 0x2000, scoped, tag = 'input window, operand 2, single buffered']
    #allocation8 [shape = 'u8[8192]{0}', space=vmem, size = 0x2000, scoped, tag = 'output window, operand 0, single buffered']
    %9 = vsyncpa [#allocation6], 0
    %10 = vsyncpa [#allocation4], 0
    %11 = vsyncpa [#allocation5], 0
    // Predicated region
    $region2: #{tpu_custom_call.1} parent=1 // pred_check
      _
    $region3: #{tpu_custom_call.1} parent=1 // pred_check_branch
      %13 = sbr.rel (0) target = $region5
    $region4: #{tpu_custom_call.1} parent=1 // pred_region
      _
    $region5: #{tpu_custom_call.1} parent=1 // pred_fallthru
      _
    // Predicated region
    $region6: #{tpu_custom_call.1} parent=1 // pred_check
      _
    $region7: #{tpu_custom_call.1} parent=1 // pred_check_branch
      %15 = sbr.rel (0) target = $region9
    $region8: #{tpu_custom_call.1} parent=1 // pred_region
      %s17 = ssub.s32 16, 16
      %18 = vsyncadd [#allocation6], %s17
      %s20 = sshll.u32 %s1, 4
      %s21 = int_to_ptr.vmem [resolvable:$true] %s20
      %23 = dma.vmem_to_smem %s21, 16, [#allocation3], [#allocation6]
    $region9: #{tpu_custom_call.1} parent=1 // pred_fallthru
      _
    // Predicated region
    $region10: #{tpu_custom_call.1} parent=1 // pred_check
      _
    $region11: #{tpu_custom_call.1} parent=1 // pred_check_branch
      %25 = sbr.rel (0) target = $region13
    $region12: #{tpu_custom_call.1} parent=1 // pred_region
      %s27 = ssub.s32 256, 256
      %28 = vsyncadd [#allocation4], %s27
      %s30 = sshll.u32 [#allocation7], 4
      %s31 = int_to_ptr.vmem [resolvable:$true] %s30
      %33 = dma.hbm_to_vmem [thread:$0]  %s2, 256, %s31, [#allocation4]
    $region13: #{tpu_custom_call.1} parent=1 // pred_fallthru
      _
    // Predicated region
    $region14: #{tpu_custom_call.1} parent=1 // pred_check
      _
    $region15: #{tpu_custom_call.1} parent=1 // pred_check_branch
      %35 = sbr.rel (0) target = $region17
    $region16: #{tpu_custom_call.1} parent=1 // pred_region
      %36 = dma.done [#allocation6], 16
    $region17: #{tpu_custom_call.1} parent=1 // pred_fallthru
      _
    // Predicated region
    $region18: #{tpu_custom_call.1} parent=1 // pred_check
      _
    $region19: #{tpu_custom_call.1} parent=1 // pred_check_branch
      %38 = sbr.rel (0) target = $region21
    $region20: #{tpu_custom_call.1} parent=1 // pred_region
      %39 = dma.done [#allocation4], 256
    $region21: #{tpu_custom_call.1} parent=1 // pred_fallthru
      _
    %40 = sfence
    %s41 = sld [smem:[#allocation2]]
    %v42 = vld [vmem:[#allocation7] sm:$0xff]
    %v43 = vld [vmem:[#allocation7 + $0x8] sm:$0xff]
    %v44 = vstv %s41
    %v45 = vmul.f32 %v44, %v42
    %v46 = vmul.f32 %v44, %v43
    %v47 = vsub.f32 0.0, %v45
    %v48 = vsub.f32 0.0, %v46
    %v49 = vmul.f32 %v47, 1.442695
    %v50 = vpow.pop %v49
    %v51 = vmul.f32 %v48, 1.442695
    %v52 = vpow.pop %v51
    %v53 = vadd.f32 %v50, 1.0
    %v54 = vadd.f32 %v52, 1.0
    %v55 = vrcp.pop %v53
    %v56 = vmul.f32 1.0, %v55
    %v57 = vrcp.pop %v54
    %v58 = vmul.f32 1.0, %v57
    %s59 = sld [smem:[#allocation3]]
    %v60 = vstv %s59
    %v61 = vmul.f32 %v60, %v50
    %v62 = vmul.f32 %v60, %v52
    %v63 = vadd.f32 %v61, 1.0
    %v64 = vadd.f32 %v62, 1.0
    %v65 = vrcp.pop %v63
    %v66 = vmul.f32 1.0, %v65
    %v67 = vrcp.pop %v64
    %v68 = vmul.f32 1.0, %v67
    %s69 = sld [smem:[#allocation3 + $0x1]]
    %v70 = vstv %s69
    %v71 = vmul.f32 %v70, %v50
    %v72 = vmul.f32 %v70, %v52
    %v73 = vadd.f32 %v71, 1.0
    %v74 = vadd.f32 %v72, 1.0
    %v75 = vrcp.pop %v73
    %v76 = vmul.f32 1.0, %v75
    %v77 = vrcp.pop %v74
    %v78 = vmul.f32 1.0, %v77
    %s79 = sld [smem:[#allocation3 + $0x2]]
    %v80 = vstv %s79
    %v81 = vmul.f32 %v80, %v50
    %v82 = vmul.f32 %v80, %v52
    %v83 = vadd.f32 %v81, 1.0
    %v84 = vadd.f32 %v82, 1.0
    %v85 = vrcp.pop %v83
    %v86 = vmul.f32 1.0, %v85
    %v87 = vrcp.pop %v84
    %v88 = vmul.f32 1.0, %v87
    %s89 = sld [smem:[#allocation3 + $0x3]]
    %v90 = vstv %s89
    %v91 = vmul.f32 %v90, %v50
    %v92 = vmul.f32 %v90, %v52
    %v93 = vadd.f32 %v91, 1.0
    %v94 = vadd.f32 %v92, 1.0
    %v95 = vrcp.pop %v93
    %v96 = vmul.f32 1.0, %v95
    %v97 = vrcp.pop %v94
    %v98 = vmul.f32 1.0, %v97
    %v99 = vadd.f32 %v66, %v76
    %v100 = vadd.f32 %v68, %v78
    %v101 = vadd.f32 %v99, %v86
    %v102 = vadd.f32 %v100, %v88
    %v103 = vadd.f32 %v101, %v96
    %v104 = vadd.f32 %v102, %v98
    %v105 = vmul.f32 %v103, 0.5
    %v106 = vmul.f32 %v104, 0.5
    %v107 = vadd.f32 %v56, %v105
    %v108 = vadd.f32 %v58, %v106
    %109 = vst [vmem:[#allocation8] sm:$0xff] %v107
    %110 = vst [vmem:[#allocation8 + $0x8] sm:$0xff] %v108
    // Predicated region
    $region22: #{tpu_custom_call.1} parent=1 // pred_check
      _
    $region23: #{tpu_custom_call.1} parent=1 // pred_check_branch
      %112 = sbr.rel (0) target = $region25
    $region24: #{tpu_custom_call.1} parent=1 // pred_region
      %s114 = ssub.s32 256, 256
      %115 = vsyncadd [#allocation5], %s114
      %s117 = sshll.u32 [#allocation8], 4
      %s118 = int_to_ptr.vmem [resolvable:$true] %s117
      %120 = dma.vmem_to_hbm [thread:$0]  %s118, 256, %s3, [#allocation5]
    $region25: #{tpu_custom_call.1} parent=1 // pred_fallthru
      _
    // Predicated region
    $region26: #{tpu_custom_call.1} parent=1 // pred_check
      _
    $region27: #{tpu_custom_call.1} parent=1 // pred_check_branch
      %122 = sbr.rel (0) target = $region29
    $region28: #{tpu_custom_call.1} parent=1 // pred_region
      %123 = dma.done [#allocation5], 256
    $region29: #{tpu_custom_call.1} parent=1 // pred_fallthru
      _
    %124 = vsyncpa [#allocation4], 1
    %125 = vsyncpa [#allocation5], 1
    %126 = vsyncpa [#allocation6], 1

</llo_original>
